<compile_context>
chip_gen: v7x
topology: tpu7x:2x2x1
jax: 0.10.0
libtpu: 0.0.40
codegen_flags: <defaults>
</compile_context>

<pallas_src>
import math

import jax
import jax.numpy as jnp
from jax import lax
from jax.experimental import pallas as pl
from jax.experimental.pallas import tpu as pltpu

_INV_SQRT2 = 1.0 / math.sqrt(2.0)


def _round_up(a, b):
    return -(-a // b) * b


def _vmem_budget_bytes():
    """Usable VMEM budget per TPU generation (leaves headroom for Mosaic scratch)."""
    cap = 64 * 1024 * 1024
    try:
        info = pltpu.get_tpu_info()
        cap = int(getattr(info, "vmem_capacity_bytes", cap) or cap)
    except Exception:
        pass
    if cap >= 100 * 1024 * 1024:
        # v5e / v6e (and v4/v5p): 128 MiB physical -> use ~100 MiB.
        return 100 * 1024 * 1024
    # v7x (64 MiB physical) or older/smaller parts: keep ~25% headroom.
    return int(cap * 3 // 4)


def _linear_gelu_kernel(x_ref, w_ref, b_ref, o_ref):
    # x_ref: (TM, K) f32   w_ref: (K, TN) bf16   b_ref: (1, TN) f32   o_ref: (TM, TN)
    x = x_ref[...].astype(jnp.bfloat16)  # in-kernel cast keeps x single-pass in HBM
    y = jnp.dot(x, w_ref[...], preferred_element_type=jnp.float32)
    y = y + b_ref[...]
    # Exact GELU (PyTorch nn.GELU default, approximate='none').
    # TODO(synk): optional tanh-approx GELU (EUP slot) for v7x when semantics allow.
    g = 0.5 * y * (1.0 + lax.erf(y * _INV_SQRT2))
    o_ref[...] = g.astype(o_ref.dtype)


def multi_head_attention_forward(x, weight, bias, *, out_dtype=None, tile_m_target=1024):
    """y = GELU(x @ weight.T + bias).

    x: [B, S, D] float32; weight: [D, D] (PyTorch layout: out x in); bias: [D].
    out_dtype: output dtype (default x.dtype; pass jnp.bfloat16 to halve store traffic).
    """
    B, S, D = x.shape
    M = B * S
    out_dtype = x.dtype if out_dtype is None else out_dtype
    out_itemsize = jnp.dtype(out_dtype).itemsize

    # ---- lane-dense layout for narrow D -------------------------------------
    pack = 128 // D if (D < 128 and 128 % D == 0) else 1
    k_eff = D * pack
    w_t = weight.T  # (D_in, D_out) so the kernel does a plain row-major x @ w
    if pack > 1:
        # (row-group of x) @ kron(I_pack, W^T) == per-row x @ W^T, lane-densely packed.
        w_eff = jnp.kron(jnp.eye(pack, dtype=w_t.dtype), w_t)
        b_eff = jnp.tile(bias, pack)
        n_eff = k_eff
    elif D < 128:
        # D does not divide 128: zero-pad the output dim up to one full lane group so
        # stores are unmasked full-lane vst; the padding is sliced off afterwards.
        n_eff = 128
        w_eff = jnp.pad(w_t, ((0, 0), (0, n_eff - D)))
        b_eff = jnp.pad(bias, (0, n_eff - D))
    else:
        w_eff, b_eff, n_eff = w_t, bias, D
    w_eff = w_eff.astype(jnp.bfloat16)
    b_eff = b_eff.reshape(1, n_eff).astype(jnp.float32)

    # ---- rows: pack, then pick an adaptive M tile against the VMEM budget ----
    m_rows = _round_up(M, pack)          # rows needed so the packed reshape is exact
    m_packed = m_rows // pack

    budget = _vmem_budget_bytes()
    w_res_bytes = 2 * k_eff * n_eff * 2  # double-buffered bf16 weight (conservative)
    bytes_per_row = 2 * (k_eff * 4 + n_eff * out_itemsize)  # dbl-buffered x (f32) + out

    weight_resident = (w_res_bytes + 16 * bytes_per_row) <= budget
    if weight_resident:
        tile_n = n_eff
        avail = budget - w_res_bytes
    else:
        tile_n = None
        for cand in (2048, 1024, 512, 256, 128):
            if n_eff % cand == 0 and 2 * k_eff * cand * 2 <= budget // 2:
                tile_n = cand
                break
        if tile_n is None:
            tile_n = n_eff               # irregular n_eff: full-width block fallback
        avail = budget - 2 * k_eff * tile_n * 2
        bytes_per_row = 2 * (k_eff * 4 + tile_n * out_itemsize)

    tile_m_vmem = max(16, (max(avail, 0) // max(1, bytes_per_row)) // 16 * 16)
    tile_m = min(tile_m_target, tile_m_vmem)
    if m_packed > 256:
        # keep >=2 M-tiles so both v7x TensorCores (megacore 'parallel' axis) are fed
        tile_m = min(tile_m, _round_up(-(-m_packed // 2), 16))
    if m_packed <= tile_m:
        tile_m = m_packed                # single full block: no row padding at all
    tile_m = max(tile_m, 1)

    m_eff = _round_up(m_packed, tile_m)
    m_rows_padded = m_eff * pack

    x2d = x.reshape(M, D)
    if m_rows_padded != M:
        x2d = jnp.pad(x2d, ((0, m_rows_padded - M), (0, 0)))
    x_eff = x2d.reshape(m_eff, k_eff)    # stays f32; cast to bf16 inside the kernel

    num_i = m_eff // tile_m
    num_j = pl.cdiv(n_eff, tile_n)

    # ---- grid / specs --------------------------------------------------------
    if weight_resident:
        grid = (num_i,)
        in_specs = [
            pl.BlockSpec((tile_m, k_eff), lambda i: (i, 0)),   # x rows
            pl.BlockSpec((k_eff, n_eff), lambda i: (0, 0)),    # full weight, resident
            pl.BlockSpec((1, n_eff), lambda i: (0, 0)),        # bias, resident
        ]
        out_specs = pl.BlockSpec((tile_m, n_eff), lambda i: (i, 0))
        dims = ("parallel",)
    else:
        # Re-stream whichever operand is cheaper to re-read from HBM.
        w_restream = num_i * k_eff * n_eff * 2   # weight re-read per M tile (j inner)
        x_restream = num_j * m_eff * k_eff * 4   # x re-read per N tile (i inner)
        if w_restream <= x_restream:
            grid = (num_i, num_j)
            in_specs = [
                pl.BlockSpec((tile_m, k_eff), lambda i, j: (i, 0)),
                pl.BlockSpec((k_eff, tile_n), lambda i, j: (0, j)),
                pl.BlockSpec((1, tile_n), lambda i, j: (0, j)),
            ]
            out_specs = pl.BlockSpec((tile_m, tile_n), lambda i, j: (i, j))
        else:
            grid = (num_j, num_i)
            in_specs = [
                pl.BlockSpec((tile_m, k_eff), lambda j, i: (i, 0)),
                pl.BlockSpec((k_eff, tile_n), lambda j, i: (0, j)),
                pl.BlockSpec((1, tile_n), lambda j, i: (0, j)),
            ]
            out_specs = pl.BlockSpec((tile_m, tile_n), lambda j, i: (i, j))
        dims = ("parallel", "parallel")

    cost = pl.CostEstimate(
        flops=2 * m_eff * k_eff * n_eff,
        transcendentals=m_eff * n_eff,
        bytes_accessed=(m_eff * k_eff * 4 + k_eff * n_eff * 2 + n_eff * 4
                        + m_eff * n_eff * out_itemsize),
    )

    out_eff = pl.pallas_call(
        _linear_gelu_kernel,
        out_shape=jax.ShapeDtypeStruct((m_eff, n_eff), out_dtype),
        grid_spec=pltpu.PrefetchScalarGridSpec(
            num_scalar_prefetch=0,
            grid=grid,
            in_specs=in_specs,
            out_specs=out_specs,
        ),
        compiler_params=pltpu.CompilerParams(
            dimension_semantics=dims,
            vmem_limit_bytes=int(budget),
        ),
        cost_estimate=cost,
    )(x_eff, w_eff, b_eff)

    # ---- undo packing / padding (no-ops for the common aligned case) --------
    if pack > 1:
        out = out_eff.reshape(m_rows_padded, D)
    else:
        out = out_eff[:, :D] if n_eff != D else out_eff
    if m_rows_padded != M:
        out = out[:M]
    return out.reshape(B, S, D).astype(out_dtype)


def reference_forward(x, weight, bias):
    y = jnp.einsum("bsd,od->bso", x, weight, precision=lax.Precision.HIGHEST) + bias
    return 0.5 * y * (1.0 + lax.erf(y / jnp.sqrt(2.0)))


if __name__ == "__main__":
    # Small shapes consistent with the module: batch=2, seq=8, embedding_dim=32.
    embedding_dim = 32
    B, S, D = 2, 8, embedding_dim

    key = jax.random.PRNGKey(0)
    kx, kw, kb = jax.random.split(key, 3)

    x = jax.random.normal(kx, (B, S, D), dtype=jnp.float32)

    # Deterministic nn.Linear-style init: U(-1/sqrt(in), 1/sqrt(in)), weight is [out, in].
    bound = 1.0 / math.sqrt(D)
    weight = jax.random.uniform(kw, (D, D), minval=-bound, maxval=bound, dtype=jnp.float32)
    bias = jax.random.uniform(kb, (D,), minval=-bound, maxval=bound, dtype=jnp.float32)

    out = multi_head_attention_forward(x, weight, bias)
    out = jax.block_until_ready(out)
    assert out.shape == (B, S, D)

    # Tight check vs a reference using the same bf16-rounded MXU operands (f32 accumulation).
    x_r = x.astype(jnp.bfloat16).astype(jnp.float32)
    w_r = weight.astype(jnp.bfloat16).astype(jnp.float32)
    ref_bf16 = reference_forward(x_r, w_r, bias)
    assert jnp.allclose(out, ref_bf16, atol=1e-3, rtol=1e-3), "mismatch vs bf16-rounded reference"

    # Loose check vs the exact f32 module semantics (tolerance accounts for bf16 MXU operands).
    ref = reference_forward(x, weight, bias)
    assert jnp.allclose(out, ref, atol=5e-2, rtol=5e-2), "mismatch vs f32 reference"

    print("KERNEL_OK")
</pallas_src>

<mosaic_0001>
module attributes {stable_mosaic.version = 11 : i64} {
  func.func @_linear_gelu_kernel(%arg0: i32, %arg1: memref<4x128xf32, #tpu.memory_space<vmem>>, %arg2: memref<128x128xbf16, #tpu.memory_space<vmem>>, %arg3: memref<1x128xf32, #tpu.memory_space<vmem>>, %arg4: memref<4x128xf32, #tpu.memory_space<vmem>>) attributes {dimension_semantics = [#tpu.dimension_semantics<parallel>], iteration_bounds = array<i64: 1>, scalar_prefetch = 0 : i64, scratch_operands = 0 : i64, tpu.core_type = #tpu.core_type<tc>, window_params = [{transform_indices = @transform_0, window_bounds = array<i64: 4, 128>}, {pipeline_mode = #tpu.pipeline_mode<synchronous>, transform_indices = @transform_1, window_bounds = array<i64: 128, 128>}, {pipeline_mode = #tpu.pipeline_mode<synchronous>, transform_indices = @transform_2, window_bounds = array<i64: 1, 128>}, {transform_indices = @transform_3, window_bounds = array<i64: 4, 128>}]} {
    %c0 = arith.constant 0 : index
    %c0_0 = arith.constant 0 : index
    %0 = vector.load %arg1[%c0, %c0_0] : memref<4x128xf32, #tpu.memory_space<vmem>>, vector<4x128xf32>
    %1 = arith.truncf %0 : vector<4x128xf32> to vector<4x128xbf16>
    %c0_1 = arith.constant 0 : index
    %c0_2 = arith.constant 0 : index
    %2 = vector.load %arg2[%c0_1, %c0_2] : memref<128x128xbf16, #tpu.memory_space<vmem>>, vector<128x128xbf16>
    %cst = arith.constant dense<0.000000e+00> : vector<4x128xf32>
    %3 = tpu.matmul %1, %2, %cst {dimension_numbers = #tpu.dot_dimension_numbers<[1], [0], [0], [1], [0, 0, 1, 1], [], []>} : vector<4x128xbf16>, vector<128x128xbf16>, vector<4x128xf32> -> vector<4x128xf32>
    %c0_3 = arith.constant 0 : index
    %c0_4 = arith.constant 0 : index
    %4 = vector.load %arg3[%c0_3, %c0_4] : memref<1x128xf32, #tpu.memory_space<vmem>>, vector<1x128xf32>
    %5 = vector.broadcast %4 : vector<1x128xf32> to vector<4x128xf32>
    %6 = arith.addf %3, %5 : vector<4x128xf32>
    %cst_5 = arith.constant 5.000000e-01 : f32
    %7 = vector.broadcast %cst_5 : f32 to vector<4x128xf32>
    %8 = arith.mulf %7, %6 : vector<4x128xf32>
    %cst_6 = arith.constant 0.707106769 : f32
    %9 = vector.broadcast %cst_6 : f32 to vector<4x128xf32>
    %10 = arith.mulf %6, %9 : vector<4x128xf32>
    %11 = math.erf %10 : vector<4x128xf32>
    %cst_7 = arith.constant 1.000000e+00 : f32
    %12 = vector.broadcast %cst_7 : f32 to vector<4x128xf32>
    %13 = arith.addf %12, %11 : vector<4x128xf32>
    %14 = arith.mulf %8, %13 : vector<4x128xf32>
    %c0_8 = arith.constant 0 : index
    %c0_9 = arith.constant 0 : index
    %15 = vector.load %arg4[%c0_8, %c0_9] : memref<4x128xf32, #tpu.memory_space<vmem>>, vector<4x128xf32>
    tpu.vector_store %arg4[%c0_8, %c0_9], %14 {strides = array<i32>} : memref<4x128xf32, #tpu.memory_space<vmem>>, vector<4x128xf32>,
    return
  }
  func.func @transform_0(%arg0: i32) -> (i32, i32) {
    %c0_i32 = arith.constant 0 : i32
    %c0_i32_0 = arith.constant 0 : i32
    return %arg0, %c0_i32 : i32, i32
  }
  func.func @transform_1(%arg0: i32) -> (i32, i32) {
    %c0_i32 = arith.constant 0 : i32
    %c0_i32_0 = arith.constant 0 : i32
    %c0_i32_1 = arith.constant 0 : i32
    return %c0_i32, %c0_i32_0 : i32, i32
  }
  func.func @transform_2(%arg0: i32) -> (i32, i32) {
    %c0_i32 = arith.constant 0 : i32
    %c0_i32_0 = arith.constant 0 : i32
    %c0_i32_1 = arith.constant 0 : i32
    return %c0_i32, %c0_i32_0 : i32, i32
  }
  func.func @transform_3(%arg0: i32) -> (i32, i32) {
    %c0_i32 = arith.constant 0 : i32
    %c0_i32_0 = arith.constant 0 : i32
    return %arg0, %c0_i32 : i32, i32
  }
}

</mosaic_0001>

<llo_original>
// kernel: tpu_custom_call.1
$region0: #{tpu_custom_call.1}
  #allocation0 [shape = 'u32[]', space=smem, size = 0x4, offset = 0x4, fixed_abs, tag = 'smem constant byte address 0x4 - core index']
  #allocation1 [shape = 'u32[144,128]{1,0:T(1,128)}', space=vmem, size = 0x12000, scoped, tag = 'internal scratch']
  %s0 = inlined_call_operand.hbm [shape: f32[4,128], index: 0, kind: input, shape index: {}]
  %s1 = inlined_call_operand.hbm [shape: bf16[128,128], index: 1, kind: input, shape index: {}]
  %s2 = inlined_call_operand.vmem [shape: f32[1,128], index: 2, kind: input, shape index: {}]
  %s3 = inlined_call_operand.hbm [shape: f32[4,128], index: 3, kind: output, shape index: {}]
  %s4 = sld [smem:[#allocation0]]
  $region30: #{tpu_custom_call.1} parent=0
    _
  %s6 = ssub.s32 1, %s4
  %s7 = scalar_select 0, %s6, %s4
  $region1: #{tpu_custom_call.1} parent=0
    #allocation2 [shape = 'u8[2048]{0}', space=vmem, size = 0x800, scoped, tag = 'input window, operand 0, single buffered']
    #allocation3 [shape = 's32[1]{0}', space=sflag, size = 0x4, scoped, tag = 'scoped memory for tpu_custom_call.1']
    #allocation4 [shape = 's32[1]{0}', space=sflag, size = 0x4, scoped, tag = 'scoped memory for tpu_custom_call.1']
    #allocation5 [shape = 'u8[32768]{0}', space=vmem, size = 0x8000, scoped, tag = 'input window, operand 1, single buffered']
    #allocation6 [shape = 's32[1]{0}', space=sflag, size = 0x4, scoped, tag = 'scoped memory for tpu_custom_call.1']
    #allocation7 [shape = 'u8[2048]{0}', space=vmem, size = 0x800, scoped, tag = 'output window, operand 0, single buffered']
    %8 = vsyncpa [#allocation3], 0
    %9 = vsyncpa [#allocation6], 0
    %10 = vsyncpa [#allocation4], 0
    // Predicated region
    $region2: #{tpu_custom_call.1} parent=1 // pred_check
      _
    $region3: #{tpu_custom_call.1} parent=1 // pred_check_branch
      %12 = sbr.rel (0) target = $region5
    $region4: #{tpu_custom_call.1} parent=1 // pred_region
      %s14 = ssub.s32 64, 64
      %15 = vsyncadd [#allocation3], %s14
      %s17 = sshll.u32 [#allocation2], 4
      %s18 = int_to_ptr.vmem [resolvable:$true] %s17
      %20 = dma.hbm_to_vmem [thread:$0]  %s0, 64, %s18, [#allocation3]
    $region5: #{tpu_custom_call.1} parent=1 // pred_fallthru
      _
    // Predicated region
    $region6: #{tpu_custom_call.1} parent=1 // pred_check
      _
    $region7: #{tpu_custom_call.1} parent=1 // pred_check_branch
      %22 = sbr.rel (0) target = $region9
    $region8: #{tpu_custom_call.1} parent=1 // pred_region
      %s24 = ssub.s32 1024, 1024
      %25 = vsyncadd [#allocation6], %s24
      %s26 = sshll.u32 [#allocation5], 4
      %s27 = int_to_ptr.vmem [resolvable:$true] %s26
      %32 = dma.hbm_to_vmem [thread:$0]  %s1, 1024, %s27, [#allocation6], 64, 64, 4
    $region9: #{tpu_custom_call.1} parent=1 // pred_fallthru
      _
    // Predicated region
    $region10: #{tpu_custom_call.1} parent=1 // pred_check
      _
    $region11: #{tpu_custom_call.1} parent=1 // pred_check_branch
      %34 = sbr.rel (0) target = $region13
    $region12: #{tpu_custom_call.1} parent=1 // pred_region
      _
    $region13: #{tpu_custom_call.1} parent=1 // pred_fallthru
      _
    // Predicated region
    $region14: #{tpu_custom_call.1} parent=1 // pred_check
      _
    $region15: #{tpu_custom_call.1} parent=1 // pred_check_branch
      %36 = sbr.rel (0) target = $region17
    $region16: #{tpu_custom_call.1} parent=1 // pred_region
      %37 = dma.done [#allocation3], 64
    $region17: #{tpu_custom_call.1} parent=1 // pred_fallthru
      _
    // Predicated region
    $region18: #{tpu_custom_call.1} parent=1 // pred_check
      _
    $region19: #{tpu_custom_call.1} parent=1 // pred_check_branch
      %39 = sbr.rel (0) target = $region21
    $region20: #{tpu_custom_call.1} parent=1 // pred_region
      %40 = dma.done [#allocation6], 1024
    $region21: #{tpu_custom_call.1} parent=1 // pred_fallthru
      _
    %v42 = vld [vmem:[#allocation2] sm:$0xf]
    %v43 = vpack.c.bf16 %v42, %v42
    %v44 = vld [vmem:[#allocation5] sm:$0xf]
    %v45 = vld [vmem:[#allocation5 + $0x4] sm:$0xf]
    %v46 = vld [vmem:[#allocation5 + $0x8] sm:$0xf]
    %v47 = vld [vmem:[#allocation5 + $0xc] sm:$0xf]
    %v48 = vld [vmem:[#allocation5 + $0x10] sm:$0xf]
    %v49 = vld [vmem:[#allocation5 + $0x14] sm:$0xf]
    %v50 = vld [vmem:[#allocation5 + $0x18] sm:$0xf]
    %v51 = vld [vmem:[#allocation5 + $0x1c] sm:$0xf]
    %v52 = vld [vmem:[#allocation5 + $0x20] sm:$0xf]
    %v53 = vld [vmem:[#allocation5 + $0x24] sm:$0xf]
    %v54 = vld [vmem:[#allocation5 + $0x28] sm:$0xf]
    %v55 = vld [vmem:[#allocation5 + $0x2c] sm:$0xf]
    %v56 = vld [vmem:[#allocation5 + $0x30] sm:$0xf]
    %v57 = vld [vmem:[#allocation5 + $0x34] sm:$0xf]
    %v58 = vld [vmem:[#allocation5 + $0x38] sm:$0xf]
    %v59 = vld [vmem:[#allocation5 + $0x3c] sm:$0xf]
    %v60 = vld [vmem:[%s2] sm:$0x1]
    %v62 = vlaneseq
    %v63 = vshrl.u32 %v62, 7
    %v64 = vsub.s32 0, %v63
    %v65 = vrot.slane %v60, %v64
    %v83 = vunpack.c.l.b16 %v44
    %v84 = vunpack.c.l.b16 %v45
    %v85 = vunpack.c.l.b16 %v46
    %v86 = vunpack.c.l.b16 %v47
    %v87 = vunpack.c.l.b16 %v48
    %v88 = vunpack.c.l.b16 %v49
    %v89 = vunpack.c.l.b16 %v50
    %v90 = vunpack.c.l.b16 %v51
    %v91 = vunpack.c.l.b16 %v52
    %v92 = vunpack.c.l.b16 %v53
    %v93 = vunpack.c.l.b16 %v54
    %v94 = vunpack.c.l.b16 %v55
    %v95 = vunpack.c.l.b16 %v56
    %v96 = vunpack.c.l.b16 %v57
    %v97 = vunpack.c.l.b16 %v58
    %v98 = vunpack.c.l.b16 %v59
    %v99 = vpack.c.b16 %v84, %v83
    %v100 = vpack.c.b16 %v86, %v85
    %v101 = vpack.c.b16 %v88, %v87
    %v102 = vpack.c.b16 %v90, %v89
    %v103 = vpack.c.b16 %v92, %v91
    %v104 = vpack.c.b16 %v94, %v93
    %v105 = vpack.c.b16 %v96, %v95
    %v106 = vpack.c.b16 %v98, %v97
    %115 = vmatprep.subr.bf16.mxu0 0
    %116 = vmatpush1.bf16.msra.mxu0 %v99
    %117 = vmatprep.subr.bf16.mxu0 0
    %118 = vmatpush1.bf16.msra.mxu0 %v100
    %119 = vmatprep.subr.bf16.mxu0 0
    %120 = vmatpush1.bf16.msra.mxu0 %v101
    %121 = vmatprep.subr.bf16.mxu0 0
    %122 = vmatpush1.bf16.msra.mxu0 %v102
    %123 = vmatprep.subr.bf16.mxu0 0
    %124 = vmatpush1.bf16.msra.mxu0 %v103
    %125 = vmatprep.subr.bf16.mxu0 0
    %126 = vmatpush1.bf16.msra.mxu0 %v104
    %127 = vmatprep.subr.bf16.mxu0 0
    %128 = vmatpush1.bf16.msra.mxu0 %v105
    %129 = vmatprep.subr.bf16.mxu0 0
    %130 = vmatpush1.bf16.msra.mxu0 %v106
    %131 = vmatprep.subr.bf16.mxu0 0
    %132 = vmatpush1.bf16.msra.mxu0 0
    %133 = vmatprep.subr.bf16.mxu0 0
    %134 = vmatpush1.bf16.msra.mxu0 0
    %135 = vmatprep.subr.bf16.mxu0 0
    %136 = vmatpush1.bf16.msra.mxu0 0
    %137 = vmatprep.subr.bf16.mxu0 0
    %138 = vmatpush1.bf16.msra.mxu0 0
    %139 = vmatprep.subr.bf16.mxu0 0
    %140 = vmatpush1.bf16.msra.mxu0 0
    %141 = vmatprep.subr.bf16.mxu0 0
    %142 = vmatpush1.bf16.msra.mxu0 0
    %143 = vmatprep.subr.bf16.mxu0 0
    %144 = vmatpush1.bf16.msra.mxu0 0
    %145 = vmatprep.subr.bf16.mxu0 0
    %146 = vmatpush1.bf16.msra.mxu0 0
    %147 = vmatprep.mubr.bf16.mxu0 0
    %148 = vmatmul.mubr.bf16.gmra.mrb[0].mxu0 %v43
    %v149 = vpop.f32.mrb[0].mxu0
    %v150 = vadd.f32 %v65, %v149
    %v151 = vpop.f32.mrb[0].mxu0
    %v152 = vpop.f32.mrb[0].mxu0
    %v153 = vpop.f32.mrb[0].mxu0
    %154 = vdwg.mxu0
    %v155 = vmul.f32 %v150, 0.5
    %v156 = vmul.f32 %v150, 0.70710677
    %v157 = verf.f32.pop %v156
    %v158 = vadd.f32 %v157, 1.0
    %v159 = vmul.f32 %v155, %v158
    %160 = vst [vmem:[#allocation7] sm:$0xf] %v159
    // Predicated region
    $region22: #{tpu_custom_call.1} parent=1 // pred_check
      _
    $region23: #{tpu_custom_call.1} parent=1 // pred_check_branch
      %162 = sbr.rel (0) target = $region25
    $region24: #{tpu_custom_call.1} parent=1 // pred_region
      %s164 = ssub.s32 64, 64
      %165 = vsyncadd [#allocation4], %s164
      %s167 = sshll.u32 [#allocation7], 4
      %s168 = int_to_ptr.vmem [resolvable:$true] %s167
      %170 = dma.vmem_to_hbm [thread:$0]  %s168, 64, %s3, [#allocation4]
    $region25: #{tpu_custom_call.1} parent=1 // pred_fallthru
      _
    // Predicated region
    $region26: #{tpu_custom_call.1} parent=1 // pred_check
      _
    $region27: #{tpu_custom_call.1} parent=1 // pred_check_branch
      %172 = sbr.rel (0) target = $region29
    $region28: #{tpu_custom_call.1} parent=1 // pred_region
      %173 = dma.done [#allocation4], 64
    $region29: #{tpu_custom_call.1} parent=1 // pred_fallthru
      _
    %174 = vsyncpa [#allocation3], 1
    %175 = vsyncpa [#allocation6], 1
    %176 = vsyncpa [#allocation4], 1

</llo_original>
